<compile_context>
chip_gen: v7x
topology: tpu7x:2x2x1
jax: 0.10.0
libtpu: 0.0.40
codegen_flags: <defaults>
</compile_context>

<pallas_src>
import functools
import math

import jax
import jax.numpy as jnp
from jax.experimental import pallas as pl
from jax.experimental.pallas import tpu as pltpu

# MXU-operand / activation-I/O dtype.  bf16 runs at full MXU rate on v5e/v6e/v7x
# and halves the HBM traffic of the (mem-bound) MLP passes; accumulation,
# bias/activation math and the normalize epilogue stay f32.
MATMUL_DTYPE = jnp.bfloat16


def _round_up(x, m):
    return ((x + m - 1) // m) * m


# ---------------------------------------------------------------------------
# Kernel 1: fused 2-layer MLP (encoder and projection head), optional fused
#           row L2-normalization epilogue.
# ---------------------------------------------------------------------------
def _mlp2_kernel(x_ref, w1_ref, b1_ref, w2_ref, b2_ref, o_ref, *, activation,
                 normalize):
    x = x_ref[...].astype(MATMUL_DTYPE)          # no-op when input already bf16
    h = jnp.dot(x, w1_ref[...], preferred_element_type=jnp.float32) + b1_ref[...]
    if activation == "relu":
        h = jnp.maximum(h, 0.0)
    elif activation == "elu":
        # torch.nn.functional.elu (alpha=1.0), expm1 for accuracy near 0.
        h = jnp.where(h > 0.0, h, jnp.expm1(h))
    else:
        raise ValueError(activation)
    o = (jnp.dot(h.astype(MATMUL_DTYPE), w2_ref[...],
                 preferred_element_type=jnp.float32) + b2_ref[...])
    if normalize:
        # Fused F.normalize: z / max(||z||, eps), via rsqrt (EUP slot, no divide).
        ss = jnp.sum(o * o, axis=-1, keepdims=True)
        o = o * jax.lax.rsqrt(jnp.maximum(ss, 1e-24))
    o_ref[...] = o.astype(o_ref.dtype)


def two_layer_mlp(x, w1, b1, w2, b2, *, activation, normalize=False,
                  out_dtype=MATMUL_DTYPE):
    n, f_in = x.shape
    h1 = w1.shape[1]
    h2 = w2.shape[1]

    # Pad the (invisible) intermediate hidden width to a lane multiple so the
    # first matmul's output / second matmul's K dim are 128-aligned.  Zero w1/b1
    # columns give activation(0)=0 and the matching zero rows of w2 contribute
    # nothing, so the result is identical.  No-op for hidden >= 128 configs.
    h1p = _round_up(h1, 128)
    if h1p != h1:
        w1 = jnp.pad(w1, ((0, 0), (0, h1p - h1)))
        b1 = jnp.pad(b1, ((0, 0), (0, h1p - h1)))
        w2 = jnp.pad(w2, ((0, h1p - h1), (0, 0)))
    # Pre-cast weights to bf16 once here (not per grid step); biases stay f32.
    w1 = w1.astype(MATMUL_DTYPE)
    w2 = w2.astype(MATMUL_DTYPE)
    b1 = b1.astype(jnp.float32)
    b2 = b2.astype(jnp.float32)

    # Large row tile (~85% of HBM roofline vs ~60% at 256); the ragged last block
    # is masked by Pallas on write-back, so there is no zero-pad concat and no
    # un-pad slice (each of those was an extra full HBM pass).
    tile_m = min(512, _round_up(n, 8))
    grid_m = pl.cdiv(n, tile_m)
    # TODO(synk): if h2 < 128 the output store is lane-masked; only matters for
    # toy hidden sizes (real arxiv config uses hidden=256).

    return pl.pallas_call(
        functools.partial(_mlp2_kernel, activation=activation, normalize=normalize),
        out_shape=jax.ShapeDtypeStruct((n, h2), out_dtype),
        grid_spec=pltpu.PrefetchScalarGridSpec(
            num_scalar_prefetch=0,
            grid=(grid_m,),
            in_specs=[
                pl.BlockSpec((tile_m, f_in), lambda i: (i, 0)),
                pl.BlockSpec((f_in, h1p), lambda i: (0, 0)),
                pl.BlockSpec((1, h1p), lambda i: (0, 0)),
                pl.BlockSpec((h1p, h2), lambda i: (0, 0)),
                pl.BlockSpec((1, h2), lambda i: (0, 0)),
            ],
            out_specs=pl.BlockSpec((tile_m, h2), lambda i: (i, 0)),
        ),
        compiler_params=pltpu.CompilerParams(dimension_semantics=("parallel",)),
    )(x, w1, b1, w2, b2)


# ---------------------------------------------------------------------------
# Kernel 2: batched InfoNCE ('info' loss), all runs of BOTH directions in one
#           invocation.  Inputs are already L2-normalized (R2, S, D) rows,
#           where rows 0..R-1 are direction-1 runs (anchors = h1 samples) and
#           rows R..2R-1 are direction-2 runs (anchors = h2 samples).
#   loss_i = log( sum_j exp(sim(a,a)/tau) + sum_j exp(sim(a,b)/tau) - e^{1/tau} )
#            - sim(a_i, b_i)/tau
# ---------------------------------------------------------------------------
def _info_loss_kernel(a_ref, b_ref, o_ref, *, inv_tau, exp_self):
    a = a_ref[...]                                  # (R2, S, D) bf16, unit-norm
    b = b_ref[...]
    af = a.astype(jnp.float32)
    bf = b.astype(jnp.float32)

    # Batched similarity logits on the MXU (bf16 operands, f32 accumulate).
    refl = jnp.einsum("rsd,rtd->rst", a, a,
                      preferred_element_type=jnp.float32) * inv_tau
    betw = jnp.einsum("rsd,rtd->rst", a, b,
                      preferred_element_type=jnp.float32) * inv_tau
    # between-diagonal via a per-row dot: O(R*S*D) VPU work instead of an eye
    # mask + O(S^2) masked reduction.
    diag = jnp.sum(af * bf, axis=-1) * inv_tau      # (R2, S), lane-major

    # refl diagonal is exp(||a_i||^2 / tau) == exp(1/tau) for unit-norm rows
    # (this matches the f32 reference exactly; the bf16 matmul entry only
    # differs by ~1e-3 relative, which is within the bf16 approximation).
    denom = (jnp.sum(jnp.exp(refl), axis=-1)
             + jnp.sum(jnp.exp(betw), axis=-1) - exp_self)   # (R2, S)
    # NOTE: no log-sum-exp stabilization; logits lie in [-1/tau, 1/tau] because
    # rows are unit-norm, so exp() is safe for tau >~ 0.012 (tau=0.5 here).
    o_ref[...] = jnp.log(denom) - diag              # (R2, S) lane-dense store


def info_loss_batched(anchors, others, *, tau):
    """anchors/others: (R2, S, D) pre-normalized rows -> per-anchor losses (R2, S)."""
    r2, s, d = anchors.shape
    kernel = functools.partial(_info_loss_kernel, inv_tau=1.0 / tau,
                               exp_self=math.exp(1.0 / tau))
    # TODO(synk): for sample_n >~ 1K the (R2, S, S) exp matrices exceed VMEM
    # (esp. v7x 64 MiB); add a flash-style column-tiled grid axis with running
    # row sums if sample_n is scaled up.
    return pl.pallas_call(
        kernel,
        out_shape=jax.ShapeDtypeStruct((r2, s), jnp.float32),
        grid_spec=pltpu.PrefetchScalarGridSpec(
            num_scalar_prefetch=0,
            grid=(1,),
            in_specs=[pl.BlockSpec((r2, s, d), lambda i: (0, 0, 0)),
                      pl.BlockSpec((r2, s, d), lambda i: (0, 0, 0))],
            out_specs=pl.BlockSpec((r2, s), lambda i: (0, 0)),
        ),
    )(anchors, others)


# ---------------------------------------------------------------------------
# Model glue (mirrors the PyTorch Model; args.encoder='MLP', args.loss='info')
# ---------------------------------------------------------------------------
class GraceModel:
    def __init__(self, params, tau=0.5, total_runs=5):
        self.p = params
        self.tau = tau
        self.total_runs = total_runs

    # forward(): 'MLP' encoder branch; edge_index is unused by the MLP encoder.
    def forward(self, x, edge_index=None):
        del edge_index
        p = self.p
        return two_layer_mlp(x, p["enc_w1"], p["enc_b1"], p["enc_w2"], p["enc_b2"],
                             activation="relu")

    # projection(): fc2(F.elu(fc1(z))) -- PyTorch-faithful (no normalization).
    def projection(self, z):
        p = self.p
        return two_layer_mlp(z, p["fc1_w"], p["fc1_b"], p["fc2_w"], p["fc2_b"],
                             activation="elu")

    def _projection_normalized(self, z):
        # Projection fused with the row L2-normalization that sim() would apply.
        # Normalization is per-row and permutation-invariant, so doing it once
        # here (instead of inside every sampled loss run) is exactly equivalent.
        p = self.p
        return two_layer_mlp(z, p["fc1_w"], p["fc1_b"], p["fc2_w"], p["fc2_b"],
                             activation="elu", normalize=True)

    def _sample_runs(self, key, anchor, other, s):
        """Mirrors sample_loss()'s reassign-and-truncate permutation chain."""
        cur_a, cur_b = anchor, other
        a_runs, b_runs = [], []
        for _ in range(self.total_runs):
            key, sub = jax.random.split(key)
            perm = jax.random.permutation(sub, cur_a.shape[0])
            cur_a = cur_a[perm][:s]
            cur_b = cur_b[perm][:s]
            a_runs.append(cur_a)
            b_runs.append(cur_b)
        return a_runs, b_runs

    def loss(self, z1, z2, key, mean=True, sample_n=64):
        n = z1.shape[0]
        s = sample_n
        # One fused projection(+normalize) launch for both views.
        h = self._projection_normalized(jnp.concatenate([z1, z2], axis=0))
        h1, h2 = h[:n], h[n:]

        # Independent permutation chains per direction, faithful to the reference
        # calling sample_loss(h1, h2) and sample_loss(h2, h1) separately.
        key1, key2 = jax.random.split(key)
        a1, b1 = self._sample_runs(key1, h1, h2, s)   # direction 1: anchors = h1
        a2, b2 = self._sample_runs(key2, h2, h1, s)   # direction 2: anchors = h2
        anchors = jnp.stack(a1 + a2)                  # (2*runs, S, D)
        others = jnp.stack(b1 + b2)

        rows = info_loss_batched(anchors, others, tau=self.tau)   # (2*runs, S)
        r = self.total_runs
        row1 = jnp.mean(rows[:r], axis=0)   # == sample_loss(h1, h2) row vector
        row2 = jnp.mean(rows[r:], axis=0)   # == sample_loss(h2, h1) row vector
        # sample_loss(): the (S,) vector broadcasts across rows of the (S, S)
        # accumulator in the reference.
        l1 = jnp.broadcast_to(row1[None, :], (s, s))
        l2 = jnp.broadcast_to(row2[None, :], (s, s))
        ret = (l1 + l2) * 0.5
        return ret.mean() if mean else ret.sum()


def init_params(key, f_in, num_hidden, num_proj_hidden):
    ks = jax.random.split(key, 8)
    scale = 0.1

    def w(k, shape):
        return (scale * jax.random.normal(k, shape)).astype(jnp.float32)

    return {
        # MLP encoder: Linear(f_in, num_hidden) -> ReLU -> Linear(num_hidden, num_hidden)
        "enc_w1": w(ks[0], (f_in, num_hidden)),
        "enc_b1": w(ks[1], (1, num_hidden)),
        "enc_w2": w(ks[2], (num_hidden, num_hidden)),
        "enc_b2": w(ks[3], (1, num_hidden)),
        # projection head: fc1 = Linear(num_hidden, num_proj_hidden), fc2 = back
        "fc1_w": w(ks[4], (num_hidden, num_proj_hidden)),
        "fc1_b": w(ks[5], (1, num_proj_hidden)),
        "fc2_w": w(ks[6], (num_proj_hidden, num_hidden)),
        "fc2_b": w(ks[7], (1, num_hidden)),
    }


if __name__ == "__main__":
    key = jax.random.PRNGKey(0)
    k_param, k_x1, k_x2, k_edge, k_loss = jax.random.split(key, 5)

    N = 128             # nodes
    F_IN = 128          # input feature dim (arxiv features are 128-d)
    NUM_HIDDEN = 128
    NUM_PROJ_HIDDEN = 128
    SAMPLE_N = 64
    TAU = 0.5

    params = init_params(k_param, F_IN, NUM_HIDDEN, NUM_PROJ_HIDDEN)
    model = GraceModel(params, tau=TAU)

    # two "augmented views" of the node features + a dummy edge_index
    x1 = jax.random.normal(k_x1, (N, F_IN), dtype=jnp.float32)
    x2 = x1 + 0.1 * jax.random.normal(k_x2, (N, F_IN), dtype=jnp.float32)
    edge_index = jax.random.randint(k_edge, (2, 256), 0, N, dtype=jnp.int32)

    # forward (MLP encoder branch)
    fwd = jax.jit(model.forward)
    z1 = fwd(x1, edge_index)
    z2 = fwd(x2, edge_index)
    z1, z2 = jax.block_until_ready((z1, z2))
    assert z1.shape == (N, NUM_HIDDEN) and z2.shape == (N, NUM_HIDDEN)

    # contrastive loss (fused projection+normalize + single batched InfoNCE kernel)
    loss_fn = jax.jit(functools.partial(model.loss, mean=True, sample_n=SAMPLE_N))
    loss_val = jax.block_until_ready(loss_fn(z1, z2, k_loss))
    assert jnp.isfinite(loss_val)

    print("KERNEL_OK")
</pallas_src>

<mosaic_0001>
module attributes {stable_mosaic.version = 11 : i64} {
  func.func @_mlp2_kernel(%arg0: i32, %arg1: memref<128x128xf32, #tpu.memory_space<vmem>>, %arg2: memref<128x128xbf16, #tpu.memory_space<vmem>>, %arg3: memref<1x128xf32, #tpu.memory_space<vmem>>, %arg4: memref<128x128xbf16, #tpu.memory_space<vmem>>, %arg5: memref<1x128xf32, #tpu.memory_space<vmem>>, %arg6: memref<128x128xbf16, #tpu.memory_space<vmem>>) attributes {dimension_semantics = [#tpu.dimension_semantics<parallel>], iteration_bounds = array<i64: 1>, scalar_prefetch = 0 : i64, scratch_operands = 0 : i64, tpu.core_type = #tpu.core_type<tc>, window_params = [{transform_indices = @transform_0, window_bounds = array<i64: 128, 128>}, {pipeline_mode = #tpu.pipeline_mode<synchronous>, transform_indices = @transform_1, window_bounds = array<i64: 128, 128>}, {pipeline_mode = #tpu.pipeline_mode<synchronous>, transform_indices = @transform_2, window_bounds = array<i64: 1, 128>}, {pipeline_mode = #tpu.pipeline_mode<synchronous>, transform_indices = @transform_3, window_bounds = array<i64: 128, 128>}, {pipeline_mode = #tpu.pipeline_mode<synchronous>, transform_indices = @transform_4, window_bounds = array<i64: 1, 128>}, {transform_indices = @transform_5, window_bounds = array<i64: 128, 128>}]} {
    %c0 = arith.constant 0 : index
    %c0_0 = arith.constant 0 : index
    %0 = vector.load %arg1[%c0, %c0_0] : memref<128x128xf32, #tpu.memory_space<vmem>>, vector<128x128xf32>
    %1 = arith.truncf %0 : vector<128x128xf32> to vector<128x128xbf16>
    %c0_1 = arith.constant 0 : index
    %c0_2 = arith.constant 0 : index
    %2 = vector.load %arg2[%c0_1, %c0_2] : memref<128x128xbf16, #tpu.memory_space<vmem>>, vector<128x128xbf16>
    %cst = arith.constant dense<0.000000e+00> : vector<128x128xf32>
    %3 = tpu.matmul %1, %2, %cst {dimension_numbers = #tpu.dot_dimension_numbers<[1], [0], [0], [1], [0, 0, 1, 1], [], []>} : vector<128x128xbf16>, vector<128x128xbf16>, vector<128x128xf32> -> vector<128x128xf32>
    %c0_3 = arith.constant 0 : index
    %c0_4 = arith.constant 0 : index
    %4 = vector.load %arg3[%c0_3, %c0_4] : memref<1x128xf32, #tpu.memory_space<vmem>>, vector<1x128xf32>
    %5 = vector.broadcast %4 : vector<1x128xf32> to vector<128x128xf32>
    %6 = arith.addf %3, %5 : vector<128x128xf32>
    %cst_5 = arith.constant 0.000000e+00 : f32
    %7 = vector.broadcast %cst_5 : f32 to vector<128x128xf32>
    %8 = arith.maximumf %6, %7 : vector<128x128xf32>
    %9 = arith.truncf %8 : vector<128x128xf32> to vector<128x128xbf16>
    %c0_6 = arith.constant 0 : index
    %c0_7 = arith.constant 0 : index
    %10 = vector.load %arg4[%c0_6, %c0_7] : memref<128x128xbf16, #tpu.memory_space<vmem>>, vector<128x128xbf16>
    %cst_8 = arith.constant dense<0.000000e+00> : vector<128x128xf32>
    %11 = tpu.matmul %9, %10, %cst_8 {dimension_numbers = #tpu.dot_dimension_numbers<[1], [0], [0], [1], [0, 0, 1, 1], [], []>} : vector<128x128xbf16>, vector<128x128xbf16>, vector<128x128xf32> -> vector<128x128xf32>
    %c0_9 = arith.constant 0 : index
    %c0_10 = arith.constant 0 : index
    %12 = vector.load %arg5[%c0_9, %c0_10] : memref<1x128xf32, #tpu.memory_space<vmem>>, vector<1x128xf32>
    %13 = vector.broadcast %12 : vector<1x128xf32> to vector<128x128xf32>
    %14 = arith.addf %11, %13 : vector<128x128xf32>
    %15 = arith.truncf %14 : vector<128x128xf32> to vector<128x128xbf16>
    %c0_11 = arith.constant 0 : index
    %c0_12 = arith.constant 0 : index
    %16 = vector.load %arg6[%c0_11, %c0_12] : memref<128x128xbf16, #tpu.memory_space<vmem>>, vector<128x128xbf16>
    tpu.vector_store %arg6[%c0_11, %c0_12], %15 {strides = array<i32>} : memref<128x128xbf16, #tpu.memory_space<vmem>>, vector<128x128xbf16>,
    return
  }
  func.func @transform_0(%arg0: i32) -> (i32, i32) {
    %c0_i32 = arith.constant 0 : i32
    %c0_i32_0 = arith.constant 0 : i32
    return %arg0, %c0_i32 : i32, i32
  }
  func.func @transform_1(%arg0: i32) -> (i32, i32) {
    %c0_i32 = arith.constant 0 : i32
    %c0_i32_0 = arith.constant 0 : i32
    %c0_i32_1 = arith.constant 0 : i32
    return %c0_i32, %c0_i32_0 : i32, i32
  }
  func.func @transform_2(%arg0: i32) -> (i32, i32) {
    %c0_i32 = arith.constant 0 : i32
    %c0_i32_0 = arith.constant 0 : i32
    %c0_i32_1 = arith.constant 0 : i32
    return %c0_i32, %c0_i32_0 : i32, i32
  }
  func.func @transform_3(%arg0: i32) -> (i32, i32) {
    %c0_i32 = arith.constant 0 : i32
    %c0_i32_0 = arith.constant 0 : i32
    %c0_i32_1 = arith.constant 0 : i32
    return %c0_i32, %c0_i32_0 : i32, i32
  }
  func.func @transform_4(%arg0: i32) -> (i32, i32) {
    %c0_i32 = arith.constant 0 : i32
    %c0_i32_0 = arith.constant 0 : i32
    %c0_i32_1 = arith.constant 0 : i32
    return %c0_i32, %c0_i32_0 : i32, i32
  }
  func.func @transform_5(%arg0: i32) -> (i32, i32) {
    %c0_i32 = arith.constant 0 : i32
    %c0_i32_0 = arith.constant 0 : i32
    return %arg0, %c0_i32 : i32, i32
  }
}

</mosaic_0001>

<llo_original>
// kernel: forward.1
$region0: #{forward.1}
  #allocation0 [shape = 'u32[]', space=smem, size = 0x4, offset = 0x4, fixed_abs, tag = 'smem constant byte address 0x4 - core index']
  #allocation1 [shape = 'u32[144,128]{1,0:T(1,128)}', space=vmem, size = 0x12000, scoped, tag = 'internal scratch']
  %s0 = inlined_call_operand.hbm [shape: f32[128,128], index: 0, kind: input, shape index: {}]
  %s1 = inlined_call_operand.hbm [shape: bf16[128,128], index: 1, kind: input, shape index: {}]
  %s2 = inlined_call_operand.vmem [shape: f32[1,128], index: 2, kind: input, shape index: {}]
  %s3 = inlined_call_operand.hbm [shape: bf16[128,128], index: 3, kind: input, shape index: {}]
  %s4 = inlined_call_operand.vmem [shape: f32[1,128], index: 4, kind: input, shape index: {}]
  %s5 = inlined_call_operand.hbm [shape: bf16[128,128], index: 5, kind: output, shape index: {}]
  %s6 = sld [smem:[#allocation0]]
  $region42: #{forward.1} parent=0
    _
  %s8 = ssub.s32 1, %s6
  %s9 = scalar_select 0, %s8, %s6
  $region1: #{forward.1} parent=0
    #allocation2 [shape = 'u8[65536]{0}', space=vmem, size = 0x10000, scoped, tag = 'input window, operand 0, single buffered']
    #allocation3 [shape = 's32[1]{0}', space=sflag, size = 0x4, scoped, tag = 'scoped memory for forward.1']
    #allocation4 [shape = 's32[1]{0}', space=sflag, size = 0x4, scoped, tag = 'scoped memory for forward.1']
    #allocation5 [shape = 'u8[32768]{0}', space=vmem, size = 0x8000, scoped, tag = 'input window, operand 1, single buffered']
    #allocation6 [shape = 's32[1]{0}', space=sflag, size = 0x4, scoped, tag = 'scoped memory for forward.1']
    #allocation7 [shape = 'u8[32768]{0}', space=vmem, size = 0x8000, scoped, tag = 'input window, operand 3, single buffered']
    #allocation8 [shape = 'u8[32768]{0}', space=vmem, size = 0x8000, scoped, tag = 'output window, operand 0, single buffered']
    %10 = vsyncpa [#allocation3], 0
    %11 = vsyncpa [#allocation6], 0
    %12 = vsyncpa [#allocation4], 0
    // Predicated region
    $region2: #{forward.1} parent=1 // pred_check
      _
    $region3: #{forward.1} parent=1 // pred_check_branch
      %14 = sbr.rel (0) target = $region5
    $region4: #{forward.1} parent=1 // pred_region
      %s16 = ssub.s32 2048, 2048
      %17 = vsyncadd [#allocation3], %s16
      %s18 = sshll.u32 [#allocation2], 4
      %s19 = int_to_ptr.vmem [resolvable:$true] %s18
      %24 = dma.hbm_to_vmem [thread:$0]  %s0, 2048, %s19, [#allocation3], 128, 128, 8
    $region5: #{forward.1} parent=1 // pred_fallthru
      _
    // Predicated region
    $region6: #{forward.1} parent=1 // pred_check
      _
    $region7: #{forward.1} parent=1 // pred_check_branch
      %26 = sbr.rel (0) target = $region9
    $region8: #{forward.1} parent=1 // pred_region
      %s28 = ssub.s32 1024, 1024
      %29 = vsyncadd [#allocation6], %s28
      %s30 = sshll.u32 [#allocation5], 4
      %s31 = int_to_ptr.vmem [resolvable:$true] %s30
      %36 = dma.hbm_to_vmem [thread:$0]  %s1, 1024, %s31, [#allocation6], 64, 64, 4
    $region9: #{forward.1} parent=1 // pred_fallthru
      _
    // Predicated region
    $region10: #{forward.1} parent=1 // pred_check
      _
    $region11: #{forward.1} parent=1 // pred_check_branch
      %38 = sbr.rel (0) target = $region13
    $region12: #{forward.1} parent=1 // pred_region
      _
    $region13: #{forward.1} parent=1 // pred_fallthru
      _
    // Predicated region
    $region14: #{forward.1} parent=1 // pred_check
      _
    $region15: #{forward.1} parent=1 // pred_check_branch
      %40 = sbr.rel (0) target = $region17
    $region16: #{forward.1} parent=1 // pred_region
      %s42 = ssub.s32 1024, 1024
      %43 = vsyncadd [#allocation6], %s42
      %s44 = sshll.u32 [#allocation7], 4
      %s45 = int_to_ptr.vmem [resolvable:$true] %s44
      %50 = dma.hbm_to_vmem [thread:$0]  %s3, 1024, %s45, [#allocation6], 64, 64, 4
    $region17: #{forward.1} parent=1 // pred_fallthru
      _
    // Predicated region
    $region18: #{forward.1} parent=1 // pred_check
      _
    $region19: #{forward.1} parent=1 // pred_check_branch
      %52 = sbr.rel (0) target = $region21
    $region20: #{forward.1} parent=1 // pred_region
      _
    $region21: #{forward.1} parent=1 // pred_fallthru
      _
    // Predicated region
    $region22: #{forward.1} parent=1 // pred_check
      _
    $region23: #{forward.1} parent=1 // pred_check_branch
      %54 = sbr.rel (0) target = $region25
    $region24: #{forward.1} parent=1 // pred_region
      %55 = dma.done [#allocation3], 2048
    $region25: #{forward.1} parent=1 // pred_fallthru
      _
    // Predicated region
    $region26: #{forward.1} parent=1 // pred_check
      _
    $region27: #{forward.1} parent=1 // pred_check_branch
      %57 = sbr.rel (0) target = $region29
    $region28: #{forward.1} parent=1 // pred_region
      %58 = dma.done [#allocation6], 1024
    $region29: #{forward.1} parent=1 // pred_fallthru
      _
    // Predicated region
    $region30: #{forward.1} parent=1 // pred_check
      _
    $region31: #{forward.1} parent=1 // pred_check_branch
      %60 = sbr.rel (0) target = $region33
    $region32: #{forward.1} parent=1 // pred_region
      %61 = dma.done [#allocation6], 1024
    $region33: #{forward.1} parent=1 // pred_fallthru
      _
    %v63 = vld [vmem:[#allocation2] sm:$0xff]
    %v64 = vld [vmem:[#allocation2 + $0x8] sm:$0xff]
    %v65 = vld [vmem:[#allocation2 + $0x10] sm:$0xff]
    %v66 = vld [vmem:[#allocation2 + $0x18] sm:$0xff]
    %v67 = vld [vmem:[#allocation2 + $0x20] sm:$0xff]
    %v68 = vld [vmem:[#allocation2 + $0x28] sm:$0xff]
    %v69 = vld [vmem:[#allocation2 + $0x30] sm:$0xff]
    %v70 = vld [vmem:[#allocation2 + $0x38] sm:$0xff]
    %v71 = vld [vmem:[#allocation2 + $0x40] sm:$0xff]
    %v72 = vld [vmem:[#allocation2 + $0x48] sm:$0xff]
    %v73 = vld [vmem:[#allocation2 + $0x50] sm:$0xff]
    %v74 = vld [vmem:[#allocation2 + $0x58] sm:$0xff]
    %v75 = vld [vmem:[#allocation2 + $0x60] sm:$0xff]
    %v76 = vld [vmem:[#allocation2 + $0x68] sm:$0xff]
    %v77 = vld [vmem:[#allocation2 + $0x70] sm:$0xff]
    %v78 = vld [vmem:[#allocation2 + $0x78] sm:$0xff]
    %v79 = vpack.c.bf16 %v64, %v63
    %v80 = vpack.c.bf16 %v66, %v65
    %v81 = vpack.c.bf16 %v68, %v67
    %v82 = vpack.c.bf16 %v70, %v69
    %v83 = vpack.c.bf16 %v72, %v71
    %v84 = vpack.c.bf16 %v74, %v73
    %v85 = vpack.c.bf16 %v76, %v75
    %v86 = vpack.c.bf16 %v78, %v77
    %v87 = vld [vmem:[#allocation5] sm:$0xf]
    %v88 = vld [vmem:[#allocation5 + $0x4] sm:$0xf]
    %v89 = vld [vmem:[#allocation5 + $0x8] sm:$0xf]
    %v90 = vld [vmem:[#allocation5 + $0xc] sm:$0xf]
    %v91 = vld [vmem:[#allocation5 + $0x10] sm:$0xf]
    %v92 = vld [vmem:[#allocation5 + $0x14] sm:$0xf]
    %v93 = vld [vmem:[#allocation5 + $0x18] sm:$0xf]
    %v94 = vld [vmem:[#allocation5 + $0x1c] sm:$0xf]
    %v95 = vld [vmem:[#allocation5 + $0x20] sm:$0xf]
    %v96 = vld [vmem:[#allocation5 + $0x24] sm:$0xf]
    %v97 = vld [vmem:[#allocation5 + $0x28] sm:$0xf]
    %v98 = vld [vmem:[#allocation5 + $0x2c] sm:$0xf]
    %v99 = vld [vmem:[#allocation5 + $0x30] sm:$0xf]
    %v100 = vld [vmem:[#allocation5 + $0x34] sm:$0xf]
    %v101 = vld [vmem:[#allocation5 + $0x38] sm:$0xf]
    %v102 = vld [vmem:[#allocation5 + $0x3c] sm:$0xf]
    %v103 = vld [vmem:[%s2] sm:$0x1]
    %v105 = vlaneseq
    %v106 = vshrl.u32 %v105, 7
    %v107 = vsub.s32 0, %v106
    %v108 = vrot.slane %v103, %v107
    %v126 = vunpack.c.l.b16 %v87
    %v127 = vunpack.c.l.b16 %v88
    %v128 = vunpack.c.l.b16 %v89
    %v129 = vunpack.c.l.b16 %v90
    %v130 = vunpack.c.l.b16 %v91
    %v131 = vunpack.c.l.b16 %v92
    %v132 = vunpack.c.l.b16 %v93
    %v133 = vunpack.c.l.b16 %v94
    %v134 = vunpack.c.l.b16 %v95
    %v135 = vunpack.c.l.b16 %v96
    %v136 = vunpack.c.l.b16 %v97
    %v137 = vunpack.c.l.b16 %v98
    %v138 = vunpack.c.l.b16 %v99
    %v139 = vunpack.c.l.b16 %v100
    %v140 = vunpack.c.l.b16 %v101
    %v141 = vunpack.c.l.b16 %v102
    %v142 = vpack.c.b16 %v127, %v126
    %v143 = vpack.c.b16 %v129, %v128
    %v144 = vpack.c.b16 %v131, %v130
    %v145 = vpack.c.b16 %v133, %v132
    %v146 = vpack.c.b16 %v135, %v134
    %v147 = vpack.c.b16 %v137, %v136
    %v148 = vpack.c.b16 %v139, %v138
    %v149 = vpack.c.b16 %v141, %v140
    %158 = vmatprep.subr.bf16.mxu0 0
    %159 = vmatpush1.bf16.msra.mxu0 %v142
    %160 = vmatprep.subr.bf16.mxu0 0
    %161 = vmatpush1.bf16.msra.mxu0 %v143
    %162 = vmatprep.subr.bf16.mxu0 0
    %163 = vmatpush1.bf16.msra.mxu0 %v144
    %164 = vmatprep.subr.bf16.mxu0 0
    %165 = vmatpush1.bf16.msra.mxu0 %v145
    %166 = vmatprep.subr.bf16.mxu0 0
    %167 = vmatpush1.bf16.msra.mxu0 %v146
    %168 = vmatprep.subr.bf16.mxu0 0
    %169 = vmatpush1.bf16.msra.mxu0 %v147
    %170 = vmatprep.subr.bf16.mxu0 0
    %171 = vmatpush1.bf16.msra.mxu0 %v148
    %172 = vmatprep.subr.bf16.mxu0 0
    %173 = vmatpush1.bf16.msra.mxu0 %v149
    %174 = vmatprep.subr.bf16.mxu0 0
    %175 = vmatpush1.bf16.msra.mxu0 0
    %176 = vmatprep.subr.bf16.mxu0 0
    %177 = vmatpush1.bf16.msra.mxu0 0
    %178 = vmatprep.subr.bf16.mxu0 0
    %179 = vmatpush1.bf16.msra.mxu0 0
    %180 = vmatprep.subr.bf16.mxu0 0
    %181 = vmatpush1.bf16.msra.mxu0 0
    %182 = vmatprep.subr.bf16.mxu0 0
    %183 = vmatpush1.bf16.msra.mxu0 0
    %184 = vmatprep.subr.bf16.mxu0 0
    %185 = vmatpush1.bf16.msra.mxu0 0
    %186 = vmatprep.subr.bf16.mxu0 0
    %187 = vmatpush1.bf16.msra.mxu0 0
    %188 = vmatprep.subr.bf16.mxu0 0
    %189 = vmatpush1.bf16.msra.mxu0 0
    %190 = vmatprep.mubr.bf16.mxu0 0
    %191 = vmatmul.mubr.bf16.gmra.mrb[0].mxu0 %v79
    %v192 = vpop.f32.mrb[0].mxu0
    %v193 = vadd.f32 %v108, %v192
    %v194 = vpop.f32.mrb[0].mxu0
    %v195 = vpop.f32.mrb[0].mxu0
    %v196 = vadd.f32 %v108, %v195
    %v197 = vpop.f32.mrb[0].mxu0
    %198 = vmatprep.mubr.bf16.mxu0 0
    %199 = vmatmul.mubr.bf16.gmra.mrb[0].mxu0 %v80
    %v200 = vpop.f32.mrb[0].mxu0
    %v201 = vadd.f32 %v108, %v200
    %v202 = vpop.f32.mrb[0].mxu0
    %v203 = vpop.f32.mrb[0].mxu0
    %v204 = vadd.f32 %v108, %v203
    %v205 = vpop.f32.mrb[0].mxu0
    %206 = vmatprep.mubr.bf16.mxu0 0
    %207 = vmatmul.mubr.bf16.gmra.mrb[0].mxu0 %v81
    %v208 = vpop.f32.mrb[0].mxu0
    %v209 = vadd.f32 %v108, %v208
    %v210 = vpop.f32.mrb[0].mxu0
    %v211 = vpop.f32.mrb[0].mxu0
    %v212 = vadd.f32 %v108, %v211
    %v213 = vpop.f32.mrb[0].mxu0
    %214 = vmatprep.mubr.bf16.mxu0 0
    %215 = vmatmul.mubr.bf16.gmra.mrb[0].mxu0 %v82
    %v216 = vpop.f32.mrb[0].mxu0
    %v217 = vadd.f32 %v108, %v216
    %v218 = vpop.f32.mrb[0].mxu0
    %v219 = vpop.f32.mrb[0].mxu0
    %v220 = vadd.f32 %v108, %v219
    %v221 = vpop.f32.mrb[0].mxu0
    %222 = vmatprep.mubr.bf16.mxu0 0
    %223 = vmatmul.mubr.bf16.gmra.mrb[0].mxu0 %v83
    %v224 = vpop.f32.mrb[0].mxu0
    %v225 = vadd.f32 %v108, %v224
    %v226 = vpop.f32.mrb[0].mxu0
    %v227 = vpop.f32.mrb[0].mxu0
    %v228 = vadd.f32 %v108, %v227
    %v229 = vpop.f32.mrb[0].mxu0
    %230 = vmatprep.mubr.bf16.mxu0 0
    %231 = vmatmul.mubr.bf16.gmra.mrb[0].mxu0 %v84
    %v232 = vpop.f32.mrb[0].mxu0
    %v233 = vadd.f32 %v108, %v232
    %v234 = vpop.f32.mrb[0].mxu0
    %v235 = vpop.f32.mrb[0].mxu0
    %v236 = vadd.f32 %v108, %v235
    %v237 = vpop.f32.mrb[0].mxu0
    %238 = vmatprep.mubr.bf16.mxu0 0
    %239 = vmatmul.mubr.bf16.gmra.mrb[0].mxu0 %v85
    %v240 = vpop.f32.mrb[0].mxu0
    %v241 = vadd.f32 %v108, %v240
    %v242 = vpop.f32.mrb[0].mxu0
    %v243 = vpop.f32.mrb[0].mxu0
    %v244 = vadd.f32 %v108, %v243
    %v245 = vpop.f32.mrb[0].mxu0
    %246 = vmatprep.mubr.bf16.mxu0 0
    %247 = vmatmul.mubr.bf16.gmra.mrb[0].mxu0 %v86
    %v248 = vpop.f32.mrb[0].mxu0
    %v249 = vadd.f32 %v108, %v248
    %v250 = vpop.f32.mrb[0].mxu0
    %v251 = vpop.f32.mrb[0].mxu0
    %v252 = vadd.f32 %v108, %v251
    %v253 = vpop.f32.mrb[0].mxu0
    %254 = vdwg.mxu0
    %v255 = vmax.f32 %v193, 0.0
    %v256 = vmax.f32 %v196, 0.0
    %v257 = vmax.f32 %v201, 0.0
    %v258 = vmax.f32 %v204, 0.0
    %v259 = vmax.f32 %v209, 0.0
    %v260 = vmax.f32 %v212, 0.0
    %v261 = vmax.f32 %v217, 0.0
    %v262 = vmax.f32 %v220, 0.0
    %v263 = vmax.f32 %v225, 0.0
    %v264 = vmax.f32 %v228, 0.0
    %v265 = vmax.f32 %v233, 0.0
    %v266 = vmax.f32 %v236, 0.0
    %v267 = vmax.f32 %v241, 0.0
    %v268 = vmax.f32 %v244, 0.0
    %v269 = vmax.f32 %v249, 0.0
    %v270 = vmax.f32 %v252, 0.0
    %v271 = vpack.c.bf16 %v256, %v255
    %v272 = vpack.c.bf16 %v258, %v257
    %v273 = vpack.c.bf16 %v260, %v259
    %v274 = vpack.c.bf16 %v262, %v261
    %v275 = vpack.c.bf16 %v264, %v263
    %v276 = vpack.c.bf16 %v266, %v265
    %v277 = vpack.c.bf16 %v268, %v267
    %v278 = vpack.c.bf16 %v270, %v269
    %v279 = vld [vmem:[#allocation7] sm:$0xf]
    %v280 = vld [vmem:[#allocation7 + $0x4] sm:$0xf]
    %v281 = vld [vmem:[#allocation7 + $0x8] sm:$0xf]
    %v282 = vld [vmem:[#allocation7 + $0xc] sm:$0xf]
    %v283 = vld [vmem:[#allocation7 + $0x10] sm:$0xf]
    %v284 = vld [vmem:[#allocation7 + $0x14] sm:$0xf]
    %v285 = vld [vmem:[#allocation7 + $0x18] sm:$0xf]
    %v286 = vld [vmem:[#allocation7 + $0x1c] sm:$0xf]
    %v287 = vld [vmem:[#allocation7 + $0x20] sm:$0xf]
    %v288 = vld [vmem:[#allocation7 + $0x24] sm:$0xf]
    %v289 = vld [vmem:[#allocation7 + $0x28] sm:$0xf]
    %v290 = vld [vmem:[#allocation7 + $0x2c] sm:$0xf]
    %v291 = vld [vmem:[#allocation7 + $0x30] sm:$0xf]
    %v292 = vld [vmem:[#allocation7 + $0x34] sm:$0xf]
    %v293 = vld [vmem:[#allocation7 + $0x38] sm:$0xf]
    %v294 = vld [vmem:[#allocation7 + $0x3c] sm:$0xf]
    %v295 = vld [vmem:[%s4] sm:$0x1]
    %v297 = vlaneseq
    %v298 = vshrl.u32 %v297, 7
    %v299 = vsub.s32 0, %v298
    %v300 = vrot.slane %v295, %v299
    %v318 = vunpack.c.l.b16 %v279
    %v319 = vunpack.c.l.b16 %v280
    %v320 = vunpack.c.l.b16 %v281
    %v321 = vunpack.c.l.b16 %v282
    %v322 = vunpack.c.l.b16 %v283
    %v323 = vunpack.c.l.b16 %v284
    %v324 = vunpack.c.l.b16 %v285
    %v325 = vunpack.c.l.b16 %v286
    %v326 = vunpack.c.l.b16 %v287
    %v327 = vunpack.c.l.b16 %v288
    %v328 = vunpack.c.l.b16 %v289
    %v329 = vunpack.c.l.b16 %v290
    %v330 = vunpack.c.l.b16 %v291
    %v331 = vunpack.c.l.b16 %v292
    %v332 = vunpack.c.l.b16 %v293
    %v333 = vunpack.c.l.b16 %v294
    %v334 = vpack.c.b16 %v319, %v318
    %v335 = vpack.c.b16 %v321, %v320
    %v336 = vpack.c.b16 %v323, %v322
    %v337 = vpack.c.b16 %v325, %v324
    %v338 = vpack.c.b16 %v327, %v326
    %v339 = vpack.c.b16 %v329, %v328
    %v340 = vpack.c.b16 %v331, %v330
    %v341 = vpack.c.b16 %v333, %v332
    %350 = vmatprep.subr.bf16.mxu0 0
    %351 = vmatpush1.bf16.msra.mxu0 %v334
    %352 = vmatprep.subr.bf16.mxu0 0
    %353 = vmatpush1.bf16.msra.mxu0 %v335
    %354 = vmatprep.subr.bf16.mxu0 0
    %355 = vmatpush1.bf16.msra.mxu0 %v336
    %356 = vmatprep.subr.bf16.mxu0 0
    %357 = vmatpush1.bf16.msra.mxu0 %v337
    %358 = vmatprep.subr.bf16.mxu0 0
    %359 = vmatpush1.bf16.msra.mxu0 %v338
    %360 = vmatprep.subr.bf16.mxu0 0
    %361 = vmatpush1.bf16.msra.mxu0 %v339
    %362 = vmatprep.subr.bf16.mxu0 0
    %363 = vmatpush1.bf16.msra.mxu0 %v340
    %364 = vmatprep.subr.bf16.mxu0 0
    %365 = vmatpush1.bf16.msra.mxu0 %v341
    %366 = vmatprep.subr.bf16.mxu0 0
    %367 = vmatpush1.bf16.msra.mxu0 0
    %368 = vmatprep.subr.bf16.mxu0 0
    %369 = vmatpush1.bf16.msra.mxu0 0
    %370 = vmatprep.subr.bf16.mxu0 0
    %371 = vmatpush1.bf16.msra.mxu0 0
    %372 = vmatprep.subr.bf16.mxu0 0
    %373 = vmatpush1.bf16.msra.mxu0 0
    %374 = vmatprep.subr.bf16.mxu0 0
    %375 = vmatpush1.bf16.msra.mxu0 0
    %376 = vmatprep.subr.bf16.mxu0 0
    %377 = vmatpush1.bf16.msra.mxu0 0
    %378 = vmatprep.subr.bf16.mxu0 0
    %379 = vmatpush1.bf16.msra.mxu0 0
    %380 = vmatprep.subr.bf16.mxu0 0
    %381 = vmatpush1.bf16.msra.mxu0 0
    %382 = vmatprep.mubr.bf16.mxu0 0
    %383 = vmatmul.mubr.bf16.gmra.mrb[0].mxu0 %v271
    %v384 = vpop.f32.mrb[0].mxu0
    %v385 = vadd.f32 %v300, %v384
    %v386 = vpop.f32.mrb[0].mxu0
    %v387 = vpop.f32.mrb[0].mxu0
    %v388 = vadd.f32 %v300, %v387
    %v389 = vpop.f32.mrb[0].mxu0
    %390 = vmatprep.mubr.bf16.mxu0 0
    %391 = vmatmul.mubr.bf16.gmra.mrb[0].mxu0 %v272
    %v392 = vpop.f32.mrb[0].mxu0
    %v393 = vadd.f32 %v300, %v392
    %v394 = vpop.f32.mrb[0].mxu0
    %v395 = vpop.f32.mrb[0].mxu0
    %v396 = vadd.f32 %v300, %v395
    %v397 = vpop.f32.mrb[0].mxu0
    %398 = vmatprep.mubr.bf16.mxu0 0
    %399 = vmatmul.mubr.bf16.gmra.mrb[0].mxu0 %v273
    %v400 = vpop.f32.mrb[0].mxu0
    %v401 = vadd.f32 %v300, %v400
    %v402 = vpop.f32.mrb[0].mxu0
    %v403 = vpop.f32.mrb[0].mxu0
    %v404 = vadd.f32 %v300, %v403
    %v405 = vpop.f32.mrb[0].mxu0
    %406 = vmatprep.mubr.bf16.mxu0 0
    %407 = vmatmul.mubr.bf16.gmra.mrb[0].mxu0 %v274
    %v408 = vpop.f32.mrb[0].mxu0
    %v409 = vadd.f32 %v300, %v408
    %v410 = vpop.f32.mrb[0].mxu0
    %v411 = vpop.f32.mrb[0].mxu0
    %v412 = vadd.f32 %v300, %v411
    %v413 = vpop.f32.mrb[0].mxu0
    %414 = vmatprep.mubr.bf16.mxu0 0
    %415 = vmatmul.mubr.bf16.gmra.mrb[0].mxu0 %v275
    %v416 = vpop.f32.mrb[0].mxu0
    %v417 = vadd.f32 %v300, %v416
    %v418 = vpop.f32.mrb[0].mxu0
    %v419 = vpop.f32.mrb[0].mxu0
    %v420 = vadd.f32 %v300, %v419
    %v421 = vpop.f32.mrb[0].mxu0
    %422 = vmatprep.mubr.bf16.mxu0 0
    %423 = vmatmul.mubr.bf16.gmra.mrb[0].mxu0 %v276
    %v424 = vpop.f32.mrb[0].mxu0
    %v425 = vadd.f32 %v300, %v424
    %v426 = vpop.f32.mrb[0].mxu0
    %v427 = vpop.f32.mrb[0].mxu0
    %v428 = vadd.f32 %v300, %v427
    %v429 = vpop.f32.mrb[0].mxu0
    %430 = vmatprep.mubr.bf16.mxu0 0
    %431 = vmatmul.mubr.bf16.gmra.mrb[0].mxu0 %v277
    %v432 = vpop.f32.mrb[0].mxu0
    %v433 = vadd.f32 %v300, %v432
    %v434 = vpop.f32.mrb[0].mxu0
    %v435 = vpop.f32.mrb[0].mxu0
    %v436 = vadd.f32 %v300, %v435
    %v437 = vpop.f32.mrb[0].mxu0
    %438 = vmatprep.mubr.bf16.mxu0 0
    %439 = vmatmul.mubr.bf16.gmra.mrb[0].mxu0 %v278
    %v440 = vpop.f32.mrb[0].mxu0
    %v441 = vadd.f32 %v300, %v440
    %v442 = vpop.f32.mrb[0].mxu0
    %v443 = vpop.f32.mrb[0].mxu0
    %v444 = vadd.f32 %v300, %v443
    %v445 = vpop.f32.mrb[0].mxu0
    %446 = vdwg.mxu0
    %v447 = vpack.c.bf16 %v388, %v385
    %v448 = vpack.c.bf16 %v396, %v393
    %v449 = vpack.c.bf16 %v404, %v401
    %v450 = vpack.c.bf16 %v412, %v409
    %v451 = vpack.c.bf16 %v420, %v417
    %v452 = vpack.c.bf16 %v428, %v425
    %v453 = vpack.c.bf16 %v436, %v433
    %v454 = vpack.c.bf16 %v444, %v441
    %v463 = vunpack.c.l.b16 %v447
    %v464 = vunpack.c.h.b16 %v447
    %v465 = vunpack.c.l.b16 %v448
    %v466 = vunpack.c.h.b16 %v448
    %v467 = vunpack.c.l.b16 %v449
    %v468 = vunpack.c.h.b16 %v449
    %v469 = vunpack.c.l.b16 %v450
    %v470 = vunpack.c.h.b16 %v450
    %v471 = vunpack.c.l.b16 %v451
    %v472 = vunpack.c.h.b16 %v451
    %v473 = vunpack.c.l.b16 %v452
    %v474 = vunpack.c.h.b16 %v452
    %v475 = vunpack.c.l.b16 %v453
    %v476 = vunpack.c.h.b16 %v453
    %v477 = vunpack.c.l.b16 %v454
    %v478 = vunpack.c.h.b16 %v454
    %v479 = vpack.c.b16 %v463, %v463
    %v480 = vpack.c.b16 %v464, %v464
    %v481 = vpack.c.b16 %v465, %v465
    %v482 = vpack.c.b16 %v466, %v466
    %v483 = vpack.c.b16 %v467, %v467
    %v484 = vpack.c.b16 %v468, %v468
    %v485 = vpack.c.b16 %v469, %v469
    %v486 = vpack.c.b16 %v470, %v470
    %v487 = vpack.c.b16 %v471, %v471
    %v488 = vpack.c.b16 %v472, %v472
    %v489 = vpack.c.b16 %v473, %v473
    %v490 = vpack.c.b16 %v474, %v474
    %v491 = vpack.c.b16 %v475, %v475
    %v492 = vpack.c.b16 %v476, %v476
    %v493 = vpack.c.b16 %v477, %v477
    %v494 = vpack.c.b16 %v478, %v478
    %511 = vst [vmem:[#allocation8] sm:$0xf] %v479
    %512 = vst [vmem:[#allocation8 + $0x4] sm:$0xf] %v480
    %513 = vst [vmem:[#allocation8 + $0x8] sm:$0xf] %v481
    %514 = vst [vmem:[#allocation8 + $0xc] sm:$0xf] %v482
    %515 = vst [vmem:[#allocation8 + $0x10] sm:$0xf] %v483
    %516 = vst [vmem:[#allocation8 + $0x14] sm:$0xf] %v484
    %517 = vst [vmem:[#allocation8 + $0x18] sm:$0xf] %v485
    %518 = vst [vmem:[#allocation8 + $0x1c] sm:$0xf] %v486
    %519 = vst [vmem:[#allocation8 + $0x20] sm:$0xf] %v487
    %520 = vst [vmem:[#allocation8 + $0x24] sm:$0xf] %v488
    %521 = vst [vmem:[#allocation8 + $0x28] sm:$0xf] %v489
    %522 = vst [vmem:[#allocation8 + $0x2c] sm:$0xf] %v490
    %523 = vst [vmem:[#allocation8 + $0x30] sm:$0xf] %v491
    %524 = vst [vmem:[#allocation8 + $0x34] sm:$0xf] %v492
    %525 = vst [vmem:[#allocation8 + $0x38] sm:$0xf] %v493
    %526 = vst [vmem:[#allocation8 + $0x3c] sm:$0xf] %v494
    // Predicated region
    $region34: #{forward.1} parent=1 // pred_check
      _
    $region35: #{forward.1} parent=1 // pred_check_branch
      %528 = sbr.rel (0) target = $region37
    $region36: #{forward.1} parent=1 // pred_region
      %s530 = ssub.s32 1024, 1024
      %531 = vsyncadd [#allocation4], %s530
      %s532 = sshll.u32 [#allocation8], 4
      %s533 = int_to_ptr.vmem [resolvable:$true] %s532
      %538 = dma.vmem_to_hbm [thread:$0]  %s533, 1024, %s5, [#allocation4], 64, 64, 4
    $region37: #{forward.1} parent=1 // pred_fallthru
      _
    // Predicated region
    $region38: #{forward.1} parent=1 // pred_check
      _
    $region39: #{forward.1} parent=1 // pred_check_branch
      %540 = sbr.rel (0) target = $region41
    $region40: #{forward.1} parent=1 // pred_region
      %541 = dma.done [#allocation4], 1024
    $region41: #{forward.1} parent=1 // pred_fallthru
      _
    %542 = vsyncpa [#allocation3], 1
    %543 = vsyncpa [#allocation6], 1
    %544 = vsyncpa [#allocation4], 1

</llo_original>
